<compile_context>
chip_gen: v6e
topology: v6e:2x2x1
jax: 0.10.0
libtpu: 0.0.40
codegen_flags: <defaults>
</compile_context>

<pallas_src>
import functools

import jax
import jax.numpy as jnp
from jax import lax
from jax.experimental import pallas as pl
from jax.experimental.pallas import tpu as pltpu


def ranknet_kernel(mf_ref, w_ref, emb_ref, bdot_ref, idx_ref, out_ref):
    """One batch tile of the RankNet forward, lane-dense (batch on the lane axis).

    mf_ref  : (TB, M) f32   metafeatures tile, natural layout
    w_ref   : (L,  M) f32   linear weight (resident across tiles)
    emb_ref : (F,  L) f32   embedding table (resident)
    bdot_ref: (F,  1) f32   emb_table @ bias (resident)
    idx_ref : (1, TB) int32 featsel indices (batch on lanes)
    out_ref : (1, TB) f32   sigmoid scores (batch on lanes)
    """
    # latent_mf^T = W @ X^T : contract over M, result (L, TB), f32 accumulation.
    latent_mf_t = lax.dot_general(
        w_ref[...],
        mf_ref[...],
        dimension_numbers=(((1,), (1,)), ((), ())),
        preferred_element_type=jnp.float32,
    )

    # Per-method scores S[f, b] = e_f . (W x_b): one small MXU matmul -> (F, TB),
    # plus the precomputed e_f . bias term broadcast over lanes.
    s_all = jnp.dot(emb_ref[...], latent_mf_t, preferred_element_type=jnp.float32)
    s_all = s_all + bdot_ref[...]

    # F-way compare/select of each lane's row (F is tiny here).
    # TODO(synk): switch to a scalar-prefetched row gather if featsel_methods_sz
    # ever grows beyond a few hundred.
    F = emb_ref.shape[0]
    TB = idx_ref.shape[1]
    row_ids = lax.broadcasted_iota(jnp.int32, (F, TB), 0)
    score = jnp.sum(
        jnp.where(idx_ref[...] == row_ids, s_all, 0.0),
        axis=0,
        keepdims=True,
    )  # (1, TB), lane-dense

    out_ref[...] = jax.nn.sigmoid(score)


def prepare_params(weight, bias, emb_table):
    """One-time parameter prep (hoisted out of the per-call path).

    weight: (L, M) f32 (PyTorch nn.Linear layout), bias: (L,), emb_table: (F, L).
    Returns (weight_f32, emb_f32, bias_dot) with bias_dot[f] = emb_table[f] . bias,
    shaped (F, 1) so it broadcasts over lanes in-kernel.
    """
    weight = jnp.asarray(weight, jnp.float32)
    emb = jnp.asarray(emb_table, jnp.float32)
    bias_dot = (emb @ jnp.asarray(bias, jnp.float32)).reshape(-1, 1)
    return weight, emb, bias_dot


def _round_up(x, m):
    return ((x + m - 1) // m) * m


def _pick_batch_tile(B, requested):
    """Lane-aligned batch tile: whole batch if small, >= 2 tiles if large (v7x)."""
    if B <= 256:
        return B  # single tile; block == full array extent is always legal
    half = _round_up(pl.cdiv(B, 2), 128)  # keep at least 2 parallel tiles
    return max(128, min(requested, half))


@functools.partial(jax.jit, static_argnames=("batch_tile",))
def ranknet_forward(metafeatures, featsel_method, weight, emb_table, bias_dot,
                    *, batch_tile=2048):
    """metafeatures: (B, M) f32, featsel_method: (B,) int,
    weight: (L, M) f32, emb_table: (F, L) f32, bias_dot: (F, 1) f32
    (from prepare_params).  Returns (B,) f32 sigmoid scores."""
    B, M = metafeatures.shape
    L = weight.shape[0]
    F = emb_table.shape[0]

    tb = _pick_batch_tile(B, batch_tile)
    num_tiles = pl.cdiv(B, tb)

    idx_row = featsel_method.astype(jnp.int32).reshape(1, B)

    cost = pl.CostEstimate(
        flops=2 * B * L * (M + F),
        transcendentals=B,  # one exp per sigmoid output
        bytes_accessed=B * (M * 4 + 4 + 4) + (L * M + F * L + F) * 4,
    )

    out = pl.pallas_call(
        ranknet_kernel,
        out_shape=jax.ShapeDtypeStruct((1, B), jnp.float32),
        grid_spec=pltpu.PrefetchScalarGridSpec(
            num_scalar_prefetch=0,
            grid=(num_tiles,),
            in_specs=[
                # Batch-tiled metafeatures (natural layout); params resident.
                pl.BlockSpec((tb, M), lambda i: (i, 0)),
                pl.BlockSpec((L, M), lambda i: (0, 0)),
                pl.BlockSpec((F, L), lambda i: (0, 0)),
                pl.BlockSpec((F, 1), lambda i: (0, 0)),
                pl.BlockSpec((1, tb), lambda i: (0, i)),
            ],
            out_specs=pl.BlockSpec((1, tb), lambda i: (0, i)),
        ),
        compiler_params=pltpu.CompilerParams(
            # Batch tiles are independent -> megacore sharding on v7x.
            dimension_semantics=("parallel",),
        ),
        cost_estimate=cost,
    )(metafeatures.astype(jnp.float32), weight, emb_table, bias_dot, idx_row)

    return out.reshape(B)


def init_params(key, metafeatures_sz, featsel_methods_sz, latent_sz):
    """Deterministic synthetic init mirroring the module's __init__ shapes."""
    k_w, k_b, k_e = jax.random.split(key, 3)
    # nn.Linear(M, L): weight (L, M) kaiming_normal_, bias U(-1/sqrt(M), 1/sqrt(M))
    std = (2.0 / metafeatures_sz) ** 0.5
    weight = jax.random.normal(k_w, (latent_sz, metafeatures_sz), jnp.float32) * std
    bound = 1.0 / (metafeatures_sz ** 0.5)
    bias = jax.random.uniform(k_b, (latent_sz,), jnp.float32, -bound, bound)
    # nn.Embedding(F, L) with emb_init: U(-sc, sc), sc = 2/(L+1)
    sc = 2.0 / (latent_sz + 1)
    emb_table = jax.random.uniform(
        k_e, (featsel_methods_sz, latent_sz), jnp.float32, -sc, sc
    )
    return weight, bias, emb_table


def reference_forward(metafeatures, featsel_method, weight, bias, emb_table):
    latent_mf = metafeatures @ weight.T + bias
    latent_fs = emb_table[featsel_method]
    return jax.nn.sigmoid(jnp.sum(latent_mf * latent_fs, axis=1))


if __name__ == "__main__":
    METAFEATURES_SZ = 32
    FEATSEL_METHODS_SZ = 4
    LATENT_SZ = 16

    key = jax.random.PRNGKey(0)
    k_p, k_x, k_i, k_x2, k_i2 = jax.random.split(key, 5)

    weight, bias, emb_table = init_params(
        k_p, METAFEATURES_SZ, FEATSEL_METHODS_SZ, LATENT_SZ
    )
    w_p, emb_p, bdot_p = prepare_params(weight, bias, emb_table)

    # Small single-tile batch.
    B = 8
    metafeatures = jax.random.normal(k_x, (B, METAFEATURES_SZ), jnp.float32)
    featsel_method = jax.random.randint(
        k_i, (B,), 0, FEATSEL_METHODS_SZ, dtype=jnp.int32
    )
    out = jax.block_until_ready(
        ranknet_forward(metafeatures, featsel_method, w_p, emb_p, bdot_p)
    )
    ref = reference_forward(metafeatures, featsel_method, weight, bias, emb_table)
    assert out.shape == (B,)
    assert jnp.allclose(out, ref, atol=1e-5, rtol=1e-5), (out, ref)

    # Multi-tile batch with a ragged last tile (exercises tiling + masked tail).
    B2 = 300
    mf2 = jax.random.normal(k_x2, (B2, METAFEATURES_SZ), jnp.float32)
    idx2 = jax.random.randint(k_i2, (B2,), 0, FEATSEL_METHODS_SZ, dtype=jnp.int32)
    out2 = jax.block_until_ready(ranknet_forward(mf2, idx2, w_p, emb_p, bdot_p))
    ref2 = reference_forward(mf2, idx2, weight, bias, emb_table)
    assert out2.shape == (B2,)
    assert jnp.allclose(out2, ref2, atol=1e-5, rtol=1e-5), (out2, ref2)

    print("KERNEL_OK")
</pallas_src>

<mosaic_0001>
module attributes {stable_mosaic.version = 11 : i64} {
  func.func @ranknet_kernel(%arg0: i32, %arg1: memref<8x32xf32, #tpu.memory_space<vmem>>, %arg2: memref<16x32xf32, #tpu.memory_space<vmem>>, %arg3: memref<4x16xf32, #tpu.memory_space<vmem>>, %arg4: memref<4x1xf32, #tpu.memory_space<vmem>>, %arg5: memref<1x8xi32, #tpu.memory_space<vmem>>, %arg6: memref<1x8xf32, #tpu.memory_space<vmem>>) attributes {dimension_semantics = [#tpu.dimension_semantics<parallel>], iteration_bounds = array<i64: 1>, scalar_prefetch = 0 : i64, scratch_operands = 0 : i64, tpu.core_type = #tpu.core_type<tc>, window_params = [{transform_indices = @transform_0, window_bounds = array<i64: 8, 32>}, {pipeline_mode = #tpu.pipeline_mode<synchronous>, transform_indices = @transform_1, window_bounds = array<i64: 16, 32>}, {pipeline_mode = #tpu.pipeline_mode<synchronous>, transform_indices = @transform_2, window_bounds = array<i64: 4, 16>}, {pipeline_mode = #tpu.pipeline_mode<synchronous>, transform_indices = @transform_3, window_bounds = array<i64: 4, 1>}, {transform_indices = @transform_4, window_bounds = array<i64: 1, 8>}, {transform_indices = @transform_5, window_bounds = array<i64: 1, 8>}]} {
    %c0 = arith.constant 0 : index
    %c0_0 = arith.constant 0 : index
    %0 = vector.load %arg2[%c0, %c0_0] : memref<16x32xf32, #tpu.memory_space<vmem>>, vector<16x32xf32>
    %c0_1 = arith.constant 0 : index
    %c0_2 = arith.constant 0 : index
    %1 = vector.load %arg1[%c0_1, %c0_2] : memref<8x32xf32, #tpu.memory_space<vmem>>, vector<8x32xf32>
    %cst = arith.constant dense<0.000000e+00> : vector<16x8xf32>
    %2 = tpu.matmul %0, %1, %cst {dimension_numbers = #tpu.dot_dimension_numbers<[1], [1], [0], [0], [0, 0, 1, 0], [], []>} : vector<16x32xf32>, vector<8x32xf32>, vector<16x8xf32> -> vector<16x8xf32>
    %c0_3 = arith.constant 0 : index
    %c0_4 = arith.constant 0 : index
    %3 = vector.load %arg3[%c0_3, %c0_4] : memref<4x16xf32, #tpu.memory_space<vmem>>, vector<4x16xf32>
    %cst_5 = arith.constant dense<0.000000e+00> : vector<4x8xf32>
    %4 = tpu.matmul %3, %2, %cst_5 {dimension_numbers = #tpu.dot_dimension_numbers<[1], [0], [0], [1], [0, 0, 1, 1], [], []>} : vector<4x16xf32>, vector<16x8xf32>, vector<4x8xf32> -> vector<4x8xf32>
    %c0_6 = arith.constant 0 : index
    %c0_7 = arith.constant 0 : index
    %5 = vector.load %arg4[%c0_6, %c0_7] : memref<4x1xf32, #tpu.memory_space<vmem>>, vector<4x1xf32>
    %6 = vector.broadcast %5 : vector<4x1xf32> to vector<4x8xf32>
    %7 = arith.addf %4, %6 : vector<4x8xf32>
    %8 = tpu.iota {dimensions = array<i32: 0>} : vector<4x8xi32>
    %c0_8 = arith.constant 0 : index
    %c0_9 = arith.constant 0 : index
    %9 = vector.load %arg5[%c0_8, %c0_9] : memref<1x8xi32, #tpu.memory_space<vmem>>, vector<1x8xi32>
    %10 = vector.broadcast %9 : vector<1x8xi32> to vector<4x8xi32>
    %11 = arith.cmpi eq, %10, %8 : vector<4x8xi32>
    %cst_10 = arith.constant 0.000000e+00 : f32
    %12 = vector.broadcast %cst_10 : f32 to vector<4x8xf32>
    %13 = arith.select %11, %7, %12 : vector<4x8xi1>, vector<4x8xf32>
    %cst_11 = arith.constant dense<0.000000e+00> : vector<8xf32>
    %14 = vector.multi_reduction <add>, %13, %cst_11 [0] : vector<4x8xf32> to vector<8xf32>
    %15 = vector.shape_cast %14 : vector<8xf32> to vector<1x8xf32>
    %16 = arith.negf %15 : vector<1x8xf32>
    %17 = math.exp %16 : vector<1x8xf32>
    %cst_12 = arith.constant 1.000000e+00 : f32
    %18 = vector.broadcast %cst_12 : f32 to vector<1x8xf32>
    %19 = arith.addf %18, %17 : vector<1x8xf32>
    %20 = arith.divf %18, %19 : vector<1x8xf32>
    %c0_13 = arith.constant 0 : index
    %c0_14 = arith.constant 0 : index
    %21 = vector.load %arg6[%c0_13, %c0_14] : memref<1x8xf32, #tpu.memory_space<vmem>>, vector<1x8xf32>
    tpu.vector_store %arg6[%c0_13, %c0_14], %20 {strides = array<i32>} : memref<1x8xf32, #tpu.memory_space<vmem>>, vector<1x8xf32>,
    return
  }
  func.func @transform_0(%arg0: i32) -> (i32, i32) {
    %c0_i32 = arith.constant 0 : i32
    %c0_i32_0 = arith.constant 0 : i32
    return %arg0, %c0_i32 : i32, i32
  }
  func.func @transform_1(%arg0: i32) -> (i32, i32) {
    %c0_i32 = arith.constant 0 : i32
    %c0_i32_0 = arith.constant 0 : i32
    %c0_i32_1 = arith.constant 0 : i32
    return %c0_i32, %c0_i32_0 : i32, i32
  }
  func.func @transform_2(%arg0: i32) -> (i32, i32) {
    %c0_i32 = arith.constant 0 : i32
    %c0_i32_0 = arith.constant 0 : i32
    %c0_i32_1 = arith.constant 0 : i32
    return %c0_i32, %c0_i32_0 : i32, i32
  }
  func.func @transform_3(%arg0: i32) -> (i32, i32) {
    %c0_i32 = arith.constant 0 : i32
    %c0_i32_0 = arith.constant 0 : i32
    %c0_i32_1 = arith.constant 0 : i32
    return %c0_i32, %c0_i32_0 : i32, i32
  }
  func.func @transform_4(%arg0: i32) -> (i32, i32) {
    %c0_i32 = arith.constant 0 : i32
    %c0_i32_0 = arith.constant 0 : i32
    return %c0_i32, %arg0 : i32, i32
  }
  func.func @transform_5(%arg0: i32) -> (i32, i32) {
    %c0_i32 = arith.constant 0 : i32
    %c0_i32_0 = arith.constant 0 : i32
    return %c0_i32, %arg0 : i32, i32
  }
}

</mosaic_0001>

<llo_original>
// kernel: ranknet_forward.1
$region0: #{ranknet_forward.1}
  #allocation0 [shape = 'u32[]', space=smem, size = 0x4, offset = 0x4, fixed_abs, tag = 'smem constant byte address 0x4 - core index']
  #allocation1 [shape = 'u32[144,128]{1,0:T(1,128)}', space=vmem, size = 0x12000, scoped, tag = 'internal scratch']
  %s0 = inlined_call_operand.hbm [shape: f32[8,32], index: 0, kind: input, shape index: {}]
  %s1 = inlined_call_operand.hbm [shape: f32[16,32], index: 1, kind: input, shape index: {}]
  %s2 = inlined_call_operand.vmem [shape: f32[4,16], index: 2, kind: input, shape index: {}]
  %s3 = inlined_call_operand.vmem [shape: f32[4,1], index: 3, kind: input, shape index: {}]
  %s4 = inlined_call_operand.vmem [shape: s32[1,8], index: 4, kind: input, shape index: {}]
  %s5 = inlined_call_operand.hbm [shape: f32[1,8], index: 5, kind: output, shape index: {}]
  %s6 = sld [smem:[#allocation0]]
  $region38: #{ranknet_forward.1} parent=0
    _
  %s8 = ssub.s32 1, %s6
  %s9 = scalar_select 0, %s8, %s6
  $region1: #{ranknet_forward.1} parent=0
    #allocation2 [shape = 'u8[4096]{0}', space=vmem, size = 0x1000, scoped, tag = 'input window, operand 0, single buffered']
    #allocation3 [shape = 's32[1]{0}', space=sflag, size = 0x4, scoped, tag = 'scoped memory for ranknet_forward.1']
    #allocation4 [shape = 's32[1]{0}', space=sflag, size = 0x4, scoped, tag = 'scoped memory for ranknet_forward.1']
    #allocation5 [shape = 'u8[8192]{0}', space=vmem, size = 0x2000, scoped, tag = 'input window, operand 1, single buffered']
    #allocation6 [shape = 's32[1]{0}', space=sflag, size = 0x4, scoped, tag = 'scoped memory for ranknet_forward.1']
    #allocation7 [shape = 'u8[512]{0}', space=vmem, size = 0x400, scoped, tag = 'output window, operand 0, single buffered']
    %10 = vsyncpa [#allocation3], 0
    %11 = vsyncpa [#allocation6], 0
    %12 = vsyncpa [#allocation4], 0
    // Predicated region
    $region2: #{ranknet_forward.1} parent=1 // pred_check
      _
    $region3: #{ranknet_forward.1} parent=1 // pred_check_branch
      %14 = sbr.rel (0) target = $region5
    $region4: #{ranknet_forward.1} parent=1 // pred_region
      %s16 = ssub.s32 128, 128
      %17 = vsyncadd [#allocation3], %s16
      %s19 = sshll.u32 [#allocation2], 4
      %s20 = int_to_ptr.vmem [resolvable:$true] %s19
      %22 = dma.hbm_to_vmem [thread:$0]  %s0, 128, %s20, [#allocation3]
    $region5: #{ranknet_forward.1} parent=1 // pred_fallthru
      _
    // Predicated region
    $region6: #{ranknet_forward.1} parent=1 // pred_check
      _
    $region7: #{ranknet_forward.1} parent=1 // pred_check_branch
      %24 = sbr.rel (0) target = $region9
    $region8: #{ranknet_forward.1} parent=1 // pred_region
      %s26 = ssub.s32 256, 256
      %27 = vsyncadd [#allocation6], %s26
      %s28 = sshll.u32 [#allocation5], 4
      %s29 = int_to_ptr.vmem [resolvable:$true] %s28
      %34 = dma.hbm_to_vmem [thread:$0]  %s1, 256, %s29, [#allocation6], 128, 128, 8
    $region9: #{ranknet_forward.1} parent=1 // pred_fallthru
      _
    // Predicated region
    $region10: #{ranknet_forward.1} parent=1 // pred_check
      _
    $region11: #{ranknet_forward.1} parent=1 // pred_check_branch
      %36 = sbr.rel (0) target = $region13
    $region12: #{ranknet_forward.1} parent=1 // pred_region
      _
    $region13: #{ranknet_forward.1} parent=1 // pred_fallthru
      _
    // Predicated region
    $region14: #{ranknet_forward.1} parent=1 // pred_check
      _
    $region15: #{ranknet_forward.1} parent=1 // pred_check_branch
      %38 = sbr.rel (0) target = $region17
    $region16: #{ranknet_forward.1} parent=1 // pred_region
      _
    $region17: #{ranknet_forward.1} parent=1 // pred_fallthru
      _
    // Predicated region
    $region18: #{ranknet_forward.1} parent=1 // pred_check
      _
    $region19: #{ranknet_forward.1} parent=1 // pred_check_branch
      %40 = sbr.rel (0) target = $region21
    $region20: #{ranknet_forward.1} parent=1 // pred_region
      _
    $region21: #{ranknet_forward.1} parent=1 // pred_fallthru
      _
    // Predicated region
    $region22: #{ranknet_forward.1} parent=1 // pred_check
      _
    $region23: #{ranknet_forward.1} parent=1 // pred_check_branch
      %42 = sbr.rel (0) target = $region25
    $region24: #{ranknet_forward.1} parent=1 // pred_region
      %43 = dma.done [#allocation3], 128
    $region25: #{ranknet_forward.1} parent=1 // pred_fallthru
      _
    // Predicated region
    $region26: #{ranknet_forward.1} parent=1 // pred_check
      _
    $region27: #{ranknet_forward.1} parent=1 // pred_check_branch
      %45 = sbr.rel (0) target = $region29
    $region28: #{ranknet_forward.1} parent=1 // pred_region
      %46 = dma.done [#allocation6], 256
    $region29: #{ranknet_forward.1} parent=1 // pred_fallthru
      _
    %v47 = vld [vmem:[#allocation5] sm:$0xff]
    %v48 = vld [vmem:[#allocation5 + $0x8] sm:$0xff]
    %v49 = vld [vmem:[#allocation2] sm:$0xff]
    %vm50 = vcmask 261120
    %v52 = vsel %vm50, %v47, 0
    %v55 = vsel %vm50, %v48, 0
    %v58 = vsel %vm50, %v49, 0
    %60 = vmatprep.subr.mxu0 0.0
    %61 = vmatpush1.xpose.msra.mxu0 0.0
    %62 = vmatprep.subr.mxu0 0.0
    %63 = vmatpush1.xpose.msra.mxu0 0.0
    %64 = vmatprep.subr.mxu0 0.0
    %65 = vmatpush1.xpose.msra.mxu0 0.0
    %66 = vmatprep.subr.mxu0 0.0
    %67 = vmatpush1.xpose.msra.mxu0 0.0
    %68 = vmatprep.subr.mxu0 0.0
    %69 = vmatpush1.xpose.msra.mxu0 0.0
    %70 = vmatprep.subr.mxu0 0.0
    %71 = vmatpush1.xpose.msra.mxu0 0.0
    %72 = vmatprep.subr.mxu0 0.0
    %73 = vmatpush1.xpose.msra.mxu0 0.0
    %74 = vmatprep.subr.mxu0 0.0
    %75 = vmatpush1.xpose.msra.mxu0 0.0
    %76 = vmatprep.subr.mxu0 0.0
    %77 = vmatpush1.xpose.msra.mxu0 0.0
    %78 = vmatprep.subr.mxu0 0.0
    %79 = vmatpush1.xpose.msra.mxu0 0.0
    %80 = vmatprep.subr.mxu0 0.0
    %81 = vmatpush1.xpose.msra.mxu0 0.0
    %82 = vmatprep.subr.mxu0 0.0
    %83 = vmatpush1.xpose.msra.mxu0 0.0
    %84 = vmatprep.subr.mxu0 0.0
    %85 = vmatpush1.xpose.msra.mxu0 0.0
    %86 = vmatprep.subr.mxu0 0.0
    %87 = vmatpush1.xpose.msra.mxu0 0.0
    %88 = vmatprep.subr.mxu0 0.0
    %89 = vmatpush1.xpose.msra.mxu0 0.0
    %90 = vmatprep.subr.mxu0 0.0
    %91 = vmatpush1.xpose.msra.mxu0 %v58
    %92 = vmatprep.subr.mxu0 0.0
    %93 = vmatpush2.xpose.msra.mxu0 0.0
    %94 = vmatprep.subr.mxu0 0.0
    %95 = vmatpush2.xpose.msra.mxu0 0.0
    %96 = vmatprep.subr.mxu0 0.0
    %97 = vmatpush2.xpose.msra.mxu0 0.0
    %98 = vmatprep.subr.mxu0 0.0
    %99 = vmatpush2.xpose.msra.mxu0 0.0
    %100 = vmatprep.subr.mxu0 0.0
    %101 = vmatpush2.xpose.msra.mxu0 0.0
    %102 = vmatprep.subr.mxu0 0.0
    %103 = vmatpush2.xpose.msra.mxu0 0.0
    %104 = vmatprep.subr.mxu0 0.0
    %105 = vmatpush2.xpose.msra.mxu0 0.0
    %106 = vmatprep.subr.mxu0 0.0
    %107 = vmatpush2.xpose.msra.mxu0 0.0
    %108 = vmatprep.subr.mxu0 0.0
    %109 = vmatpush2.xpose.msra.mxu0 0.0
    %110 = vmatprep.subr.mxu0 0.0
    %111 = vmatpush2.xpose.msra.mxu0 0.0
    %112 = vmatprep.subr.mxu0 0.0
    %113 = vmatpush2.xpose.msra.mxu0 0.0
    %114 = vmatprep.subr.mxu0 0.0
    %115 = vmatpush2.xpose.msra.mxu0 0.0
    %116 = vmatprep.subr.mxu0 0.0
    %117 = vmatpush2.xpose.msra.mxu0 0.0
    %118 = vmatprep.subr.mxu0 0.0
    %119 = vmatpush2.xpose.msra.mxu0 0.0
    %120 = vmatprep.subr.mxu0 0.0
    %121 = vmatpush2.xpose.msra.mxu0 0.0
    %122 = vmatprep.subr.mxu0 0.0
    %123 = vmatpush2.xpose.msra.mxu0 0.0
    %124 = vmatprep.mubr.f32.mxu0 0.0
    %125 = vmatmul.mubr.f32.gmra.mxu0 %v52
    %v126 = vpop.f32.mrf.mxu0
    %v127 = vadd.f32 0.0, %v126
    %v128 = vpop.f32.mrf.mxu0
    %129 = vmatprep.mubr.f32.mxu0 0.0
    %130 = vmatmul.mubr.f32.gmra.mxu0 %v55
    %v131 = vpop.f32.mrf.mxu0
    %v132 = vadd.f32 0.0, %v131
    %v133 = vpop.f32.mrf.mxu0
    %134 = vdwg.mxu0
    %v135 = vld [vmem:[%s2] sm:$0xf]
    %v136 = vld [vmem:[%s3] sm:$0xf]
    %138 = vset.pattern.permute.xlu0 0
    %139 = vperm.xlu0 %138, %v136
    %v140 = vpop.permute.xlu0 %139
    %vm142 = vcmask 130048
    %v144 = vsel %vm142, %v135, 0
    %146 = vmatprep.subr.mxu0 0.0
    %147 = vmatpush1.msra.mxu0 0.0
    %148 = vmatprep.subr.mxu0 0.0
    %149 = vmatpush1.msra.mxu0 0.0
    %150 = vmatprep.subr.mxu0 0.0
    %151 = vmatpush1.msra.mxu0 0.0
    %152 = vmatprep.subr.mxu0 0.0
    %153 = vmatpush1.msra.mxu0 0.0
    %154 = vmatprep.subr.mxu0 0.0
    %155 = vmatpush1.msra.mxu0 0.0
    %156 = vmatprep.subr.mxu0 0.0
    %157 = vmatpush1.msra.mxu0 0.0
    %158 = vmatprep.subr.mxu0 0.0
    %159 = vmatpush1.msra.mxu0 0.0
    %160 = vmatprep.subr.mxu0 0.0
    %161 = vmatpush1.msra.mxu0 0.0
    %162 = vmatprep.subr.mxu0 0.0
    %163 = vmatpush1.msra.mxu0 0.0
    %164 = vmatprep.subr.mxu0 0.0
    %165 = vmatpush1.msra.mxu0 0.0
    %166 = vmatprep.subr.mxu0 0.0
    %167 = vmatpush1.msra.mxu0 0.0
    %168 = vmatprep.subr.mxu0 0.0
    %169 = vmatpush1.msra.mxu0 0.0
    %170 = vmatprep.subr.mxu0 0.0
    %171 = vmatpush1.msra.mxu0 0.0
    %172 = vmatprep.subr.mxu0 0.0
    %173 = vmatpush1.msra.mxu0 0.0
    %174 = vmatprep.subr.mxu0 0.0
    %175 = vmatpush1.msra.mxu0 %v132
    %176 = vmatprep.subr.mxu0 0.0
    %177 = vmatpush1.msra.mxu0 %v127
    %178 = vmatprep.subr.mxu0 0.0
    %179 = vmatpush2.msra.mxu0 0.0
    %180 = vmatprep.subr.mxu0 0.0
    %181 = vmatpush2.msra.mxu0 0.0
    %182 = vmatprep.subr.mxu0 0.0
    %183 = vmatpush2.msra.mxu0 0.0
    %184 = vmatprep.subr.mxu0 0.0
    %185 = vmatpush2.msra.mxu0 0.0
    %186 = vmatprep.subr.mxu0 0.0
    %187 = vmatpush2.msra.mxu0 0.0
    %188 = vmatprep.subr.mxu0 0.0
    %189 = vmatpush2.msra.mxu0 0.0
    %190 = vmatprep.subr.mxu0 0.0
    %191 = vmatpush2.msra.mxu0 0.0
    %192 = vmatprep.subr.mxu0 0.0
    %193 = vmatpush2.msra.mxu0 0.0
    %194 = vmatprep.subr.mxu0 0.0
    %195 = vmatpush2.msra.mxu0 0.0
    %196 = vmatprep.subr.mxu0 0.0
    %197 = vmatpush2.msra.mxu0 0.0
    %198 = vmatprep.subr.mxu0 0.0
    %199 = vmatpush2.msra.mxu0 0.0
    %200 = vmatprep.subr.mxu0 0.0
    %201 = vmatpush2.msra.mxu0 0.0
    %202 = vmatprep.subr.mxu0 0.0
    %203 = vmatpush2.msra.mxu0 0.0
    %204 = vmatprep.subr.mxu0 0.0
    %205 = vmatpush2.msra.mxu0 0.0
    %206 = vmatprep.subr.mxu0 0.0
    %207 = vmatpush2.msra.mxu0 0.0
    %208 = vmatprep.subr.mxu0 0.0
    %209 = vmatpush2.msra.mxu0 0.0
    %210 = vmatprep.mubr.f32.mxu0 0.0
    %211 = vmatmul.mubr.f32.gmra.mxu0 %v144
    %v212 = vpop.f32.mrf.mxu0
    %v213 = vadd.f32 %v140, %v212
    %v214 = vpop.f32.mrf.mxu0
    %215 = vdwg.mxu0
    %v216 = vlaneseq
    %v217 = vshrl.u32 %v216, 7
    %v218 = vld [vmem:[%s4] sm:$0x1]
    %v219 = vlaneseq
    %v220 = vshrl.u32 %v219, 7
    %v221 = vsub.s32 0, %v220
    %v222 = vrot.slane %v218, %v221
    %vm223 = vcmp.eq.s32.totalorder %v222, %v217
    %v224 = vsel %vm223, %v213, 0.0
    %vm225 = vcmask 60416
    %v226 = vsel %vm225, %v224, 0.0
    %v227 = vrot.slane %v226, 4
    %v228 = vadd.f32 %v226, %v227
    %v229 = vrot.slane %v228, 2
    %v230 = vadd.f32 %v228, %v229
    %v231 = vrot.slane %v230, 1
    %v232 = vadd.f32 %v230, %v231
    %v233 = vxor.u32 %v232, 2147483648
    %v234 = vmul.f32 %v233, 1.442695
    %v235 = vpow.pop %v234
    %v236 = vadd.f32 %v235, 1.0
    %v237 = vrcp.pop %v236
    %v238 = vmul.f32 1.0, %v237
    %vm239 = vcmask 57344
    %240 = vst.msk [vmem:[#allocation7] sm:$0x1] %vm239, %v238
    // Predicated region
    $region30: #{ranknet_forward.1} parent=1 // pred_check
      _
    $region31: #{ranknet_forward.1} parent=1 // pred_check_branch
      %242 = sbr.rel (0) target = $region33
    $region32: #{ranknet_forward.1} parent=1 // pred_region
      %s244 = ssub.s32 16, 16
      %245 = vsyncadd [#allocation4], %s244
      %s247 = sshll.u32 [#allocation7], 4
      %s248 = int_to_ptr.vmem [resolvable:$true] %s247
      %250 = dma.vmem_to_hbm [thread:$0]  %s248, 16, %s5, [#allocation4]
    $region33: #{ranknet_forward.1} parent=1 // pred_fallthru
      _
    // Predicated region
    $region34: #{ranknet_forward.1} parent=1 // pred_check
      _
    $region35: #{ranknet_forward.1} parent=1 // pred_check_branch
      %252 = sbr.rel (0) target = $region37
    $region36: #{ranknet_forward.1} parent=1 // pred_region
      %253 = dma.done [#allocation4], 16
    $region37: #{ranknet_forward.1} parent=1 // pred_fallthru
      _
    %254 = vsyncpa [#allocation3], 1
    %255 = vsyncpa [#allocation6], 1
    %256 = vsyncpa [#allocation4], 1

</llo_original>
